<compile_context>
chip_gen: v7x
topology: tpu7x:2x2x1
jax: 0.10.0
libtpu: 0.0.40
codegen_flags: <defaults>
</compile_context>

<pallas_src>
import functools

import jax
import jax.numpy as jnp
from jax.experimental import pallas as pl
from jax.experimental.pallas import tpu as pltpu

VOCAB_SIZE = 65          # synthetic vocab (tiny-Shakespeare char set size)
LANE = 128               # TPU lane width
MAX_TILE_BT = 2048       # rows per grid step (fits comfortably in scoped VMEM)
NEG_PAD = -1e30          # padded-class logit value (finite: avoids 0*inf NaN)


def _round_up(x, m):
    return (x + m - 1) // m * m


def bigram_kernel(idx_ref, tgt_ref, table_ref, logits_ref, partial_ref, *,
                  bt_actual):
    # idx_ref:     (1, TILE_BT)   int32  lane-dense token ids for this tile
    # tgt_ref:     (1, TILE_BT)   int32  lane-dense targets for this tile
    # table_ref:   (Vp, Vp)       f32    embedding table, padded cols = -1e30
    # logits_ref:  (TILE_BT, Vp)  f32    lane-dense logits store
    # partial_ref: (1, 1)         f32    per-tile NLL partial sum
    i = pl.program_id(0)
    vp = table_ref.shape[0]
    tile_bt = idx_ref.shape[1]

    idx = idx_ref[...]                                            # (1, TILE_BT)
    tgt = tgt_ref[...]                                            # (1, TILE_BT)

    # Class-id iota along sublanes; token ids stay lane-resident, so building
    # the one-hot needs no lane<->sublane relayout of the index vectors.
    vrow = jax.lax.broadcasted_iota(jnp.int32, (vp, tile_bt), 0)  # (Vp, TILE_BT)
    onehot_t = (vrow == idx).astype(jnp.float32)                  # (Vp, TILE_BT)

    table = table_ref[...]                                        # (Vp, Vp)

    # Row-major logits for the lane-dense output store:  onehot^T @ table.
    logits = jax.lax.dot_general(
        onehot_t, table, (((0,), (0,)), ((), ())),
        preferred_element_type=jnp.float32)                       # (TILE_BT, Vp)
    logits_ref[...] = logits

    # Class-major logits for the loss math:  table^T @ onehot.
    logits_t = jax.lax.dot_general(
        table, onehot_t, (((0,), (0,)), ((), ())),
        preferred_element_type=jnp.float32)                       # (Vp, TILE_BT)

    # Stable log-softmax over classes (sublane axis). Padded classes carry
    # -1e30 straight from the table pad, so no extra lane mask is needed.
    m = jnp.max(logits_t, axis=0, keepdims=True)                  # (1, TILE_BT)
    lse = m + jnp.log(jnp.sum(jnp.exp(logits_t - m),
                              axis=0, keepdims=True))             # (1, TILE_BT)

    # Target-logit gather, also lane-wise (padded classes hit the 0 branch).
    tgt_logit = jnp.sum(jnp.where(vrow == tgt, logits_t, 0.0),
                        axis=0, keepdims=True)                    # (1, TILE_BT)

    per_row = lse - tgt_logit                                     # (1, TILE_BT)

    # Mask out rows past the real B*T (row padding of the last tile).
    pos = i * tile_bt + jax.lax.broadcasted_iota(jnp.int32, (1, tile_bt), 1)
    per_row = jnp.where(pos < bt_actual, per_row, 0.0)

    partial_ref[...] = jnp.sum(per_row, axis=-1, keepdims=True)   # (1, 1)


def bigram_forward(idx, targets, table, *, return_padded_logits=False):
    """Matches BigramLanguageModel.forward: returns (logits (B*T, V), loss).

    With return_padded_logits=True the padded (bt_pad, 128) slab is returned
    instead (padded class lanes hold -1e30), which skips the extra XLA
    slice/relayout pass over the logits.
    """
    B, T = idx.shape
    V = table.shape[0]
    BT = B * T
    Vp = _round_up(V, LANE)

    tile_bt = min(MAX_TILE_BT, _round_up(BT, 8))
    bt_pad = _round_up(BT, tile_bt)
    num_tiles = bt_pad // tile_bt

    def pack(a):
        flat = a.reshape(BT).astype(jnp.int32)
        if bt_pad != BT:
            flat = jnp.pad(flat, (0, bt_pad - BT))
        return flat.reshape(num_tiles, tile_bt)

    idx2d = pack(idx)
    tgt2d = pack(targets if targets is not None else jnp.zeros_like(idx))

    # Padded class columns get -1e30 (finite!) so the in-kernel softmax never
    # sees them; padded vocab rows are never selected by a valid index.
    table_p = jnp.zeros((Vp, Vp), jnp.float32).at[:V, :V].set(
        table.astype(jnp.float32))
    table_p = table_p.at[:, V:].set(NEG_PAD)

    kernel = functools.partial(bigram_kernel, bt_actual=BT)

    logits_p, partials = pl.pallas_call(
        kernel,
        out_shape=(
            jax.ShapeDtypeStruct((bt_pad, Vp), jnp.float32),
            jax.ShapeDtypeStruct((num_tiles, 1), jnp.float32),
        ),
        grid_spec=pltpu.PrefetchScalarGridSpec(
            num_scalar_prefetch=0,
            grid=(num_tiles,),
            in_specs=[
                pl.BlockSpec((1, tile_bt), lambda i: (i, 0)),    # idx (lane-dense)
                pl.BlockSpec((1, tile_bt), lambda i: (i, 0)),    # targets
                pl.BlockSpec((Vp, Vp), lambda i: (0, 0)),        # table (resident)
            ],
            out_specs=(
                pl.BlockSpec((tile_bt, Vp), lambda i: (i, 0)),   # logits
                pl.BlockSpec((1, 1), lambda i: (i, 0)),          # per-tile loss
            ),
        ),
        compiler_params=pltpu.CompilerParams(
            # Independent tiles: lets v7x shard the row axis across both TCs.
            dimension_semantics=("parallel",),
            vmem_limit_bytes=32 * 1024 * 1024),
    )(idx2d, tgt2d, table_p)

    loss = jnp.sum(partials) / BT if targets is not None else None

    if return_padded_logits:
        return logits_p, loss
    return logits_p[:BT, :V], loss


def reference_forward(idx, targets, table):
    """Pure-JAX reference of the PyTorch forward for verification."""
    B, T = idx.shape
    V = table.shape[0]
    logits = table[idx].reshape(B * T, V)
    tgt = targets.reshape(B * T)
    lse = jax.scipy.special.logsumexp(logits, axis=-1)
    tgt_logit = jnp.take_along_axis(logits, tgt[:, None], axis=-1)[:, 0]
    loss = jnp.mean(lse - tgt_logit)
    return logits, loss


if __name__ == "__main__":
    key = jax.random.PRNGKey(0)
    k_table, k_idx, k_tgt = jax.random.split(key, 3)

    B, T, V = 2, 8, VOCAB_SIZE
    # nn.Embedding default init ~ N(0, 1)
    table = jax.random.normal(k_table, (V, V), dtype=jnp.float32)
    idx = jax.random.randint(k_idx, (B, T), 0, V, dtype=jnp.int32)
    targets = jax.random.randint(k_tgt, (B, T), 0, V, dtype=jnp.int32)

    logits, loss = bigram_forward(idx, targets, table)
    jax.block_until_ready((logits, loss))

    ref_logits, ref_loss = reference_forward(idx, targets, table)
    assert logits.shape == (B * T, V)
    assert jnp.allclose(logits, ref_logits, atol=1e-5, rtol=1e-5)
    assert jnp.allclose(loss, ref_loss, atol=1e-5, rtol=1e-5)

    # Second check with a BT that requires row padding (exercises the row mask).
    B2, T2 = 3, 7
    idx2 = jax.random.randint(jax.random.PRNGKey(1), (B2, T2), 0, V, jnp.int32)
    tgt2 = jax.random.randint(jax.random.PRNGKey(2), (B2, T2), 0, V, jnp.int32)
    logits2, loss2 = bigram_forward(idx2, tgt2, table)
    jax.block_until_ready((logits2, loss2))
    ref_logits2, ref_loss2 = reference_forward(idx2, tgt2, table)
    assert jnp.allclose(logits2, ref_logits2, atol=1e-5, rtol=1e-5)
    assert jnp.allclose(loss2, ref_loss2, atol=1e-5, rtol=1e-5)

    # TODO(synk): generate() uses torch.multinomial sampling in a host-side
    # autoregressive loop; not implemented as a kernel.
    print("KERNEL_OK")
</pallas_src>

<mosaic_0001>
module attributes {stable_mosaic.version = 11 : i64} {
  func.func @bigram_kernel(%arg0: i32, %arg1: memref<1x16xi32, #tpu.memory_space<vmem>>, %arg2: memref<1x16xi32, #tpu.memory_space<vmem>>, %arg3: memref<128x128xf32, #tpu.memory_space<vmem>>, %arg4: memref<16x128xf32, #tpu.memory_space<vmem>>, %arg5: memref<1x1xf32, #tpu.memory_space<vmem>>) attributes {dimension_semantics = [#tpu.dimension_semantics<parallel>], iteration_bounds = array<i64: 1>, scalar_prefetch = 0 : i64, scratch_operands = 0 : i64, tpu.core_type = #tpu.core_type<tc>, window_params = [{transform_indices = @transform_0, window_bounds = array<i64: 1, 16>}, {transform_indices = @transform_1, window_bounds = array<i64: 1, 16>}, {pipeline_mode = #tpu.pipeline_mode<synchronous>, transform_indices = @transform_2, window_bounds = array<i64: 128, 128>}, {transform_indices = @transform_3, window_bounds = array<i64: 16, 128>}, {transform_indices = @transform_4, window_bounds = array<i64: 1, 1>}]} {
    %c0 = arith.constant 0 : index
    %c0_0 = arith.constant 0 : index
    %0 = vector.load %arg1[%c0, %c0_0] : memref<1x16xi32, #tpu.memory_space<vmem>>, vector<1x16xi32>
    %c0_1 = arith.constant 0 : index
    %c0_2 = arith.constant 0 : index
    %1 = vector.load %arg2[%c0_1, %c0_2] : memref<1x16xi32, #tpu.memory_space<vmem>>, vector<1x16xi32>
    %2 = tpu.iota {dimensions = array<i32: 0>} : vector<128x16xi32>
    %3 = vector.broadcast %0 : vector<1x16xi32> to vector<128x16xi32>
    %4 = arith.cmpi eq, %2, %3 : vector<128x16xi32>
    %5 = arith.extui %4 : vector<128x16xi1> to vector<128x16xi32>
    %6 = arith.sitofp %5 : vector<128x16xi32> to vector<128x16xf32>
    %c0_3 = arith.constant 0 : index
    %c0_4 = arith.constant 0 : index
    %7 = vector.load %arg3[%c0_3, %c0_4] : memref<128x128xf32, #tpu.memory_space<vmem>>, vector<128x128xf32>
    %cst = arith.constant dense<0.000000e+00> : vector<16x128xf32>
    %8 = tpu.matmul %6, %7, %cst {dimension_numbers = #tpu.dot_dimension_numbers<[0], [0], [1], [1], [0, 1, 1, 1], [], []>} : vector<128x16xf32>, vector<128x128xf32>, vector<16x128xf32> -> vector<16x128xf32>
    %c0_5 = arith.constant 0 : index
    %c0_6 = arith.constant 0 : index
    %9 = vector.load %arg4[%c0_5, %c0_6] : memref<16x128xf32, #tpu.memory_space<vmem>>, vector<16x128xf32>
    tpu.vector_store %arg4[%c0_5, %c0_6], %8 {strides = array<i32>} : memref<16x128xf32, #tpu.memory_space<vmem>>, vector<16x128xf32>,
    %cst_7 = arith.constant dense<0.000000e+00> : vector<128x16xf32>
    %10 = tpu.matmul %7, %6, %cst_7 {dimension_numbers = #tpu.dot_dimension_numbers<[0], [0], [1], [1], [0, 1, 1, 1], [], []>} : vector<128x128xf32>, vector<128x16xf32>, vector<128x16xf32> -> vector<128x16xf32>
    %cst_8 = arith.constant dense<0xFF800000> : vector<16xf32>
    %11 = vector.multi_reduction <maximumf>, %10, %cst_8 [0] : vector<128x16xf32> to vector<16xf32>
    %12 = vector.shape_cast %11 : vector<16xf32> to vector<1x16xf32>
    %13 = vector.broadcast %12 : vector<1x16xf32> to vector<128x16xf32>
    %14 = arith.subf %10, %13 : vector<128x16xf32>
    %15 = math.exp %14 : vector<128x16xf32>
    %cst_9 = arith.constant dense<0.000000e+00> : vector<16xf32>
    %16 = vector.multi_reduction <add>, %15, %cst_9 [0] : vector<128x16xf32> to vector<16xf32>
    %17 = vector.shape_cast %16 : vector<16xf32> to vector<1x16xf32>
    %18 = math.log %17 : vector<1x16xf32>
    %19 = arith.addf %12, %18 : vector<1x16xf32>
    %20 = vector.broadcast %1 : vector<1x16xi32> to vector<128x16xi32>
    %21 = arith.cmpi eq, %2, %20 : vector<128x16xi32>
    %cst_10 = arith.constant 0.000000e+00 : f32
    %22 = vector.broadcast %cst_10 : f32 to vector<128x16xf32>
    %23 = arith.select %21, %10, %22 : vector<128x16xi1>, vector<128x16xf32>
    %cst_11 = arith.constant dense<0.000000e+00> : vector<16xf32>
    %24 = vector.multi_reduction <add>, %23, %cst_11 [0] : vector<128x16xf32> to vector<16xf32>
    %25 = vector.shape_cast %24 : vector<16xf32> to vector<1x16xf32>
    %26 = arith.subf %19, %25 : vector<1x16xf32>
    %c16_i32 = arith.constant 16 : i32
    %27 = arith.muli %arg0, %c16_i32 : i32
    %28 = tpu.iota {dimensions = array<i32: 1>} : vector<1x16xi32>
    %29 = vector.broadcast %27 : i32 to vector<1x16xi32>
    %30 = arith.addi %29, %28 : vector<1x16xi32>
    %c16_i32_12 = arith.constant 16 : i32
    %31 = vector.broadcast %c16_i32_12 : i32 to vector<1x16xi32>
    %32 = arith.cmpi slt, %30, %31 : vector<1x16xi32>
    %cst_13 = arith.constant 0.000000e+00 : f32
    %33 = vector.broadcast %cst_13 : f32 to vector<1x16xf32>
    %34 = arith.select %32, %26, %33 : vector<1x16xi1>, vector<1x16xf32>
    %cst_14 = arith.constant dense<0.000000e+00> : vector<1xf32>
    %35 = vector.multi_reduction <add>, %34, %cst_14 [1] : vector<1x16xf32> to vector<1xf32>
    %36 = vector.shape_cast %35 : vector<1xf32> to vector<1x1xf32>
    %c0_15 = arith.constant 0 : index
    %c0_16 = arith.constant 0 : index
    %37 = vector.load %arg5[%c0_15, %c0_16] : memref<1x1xf32, #tpu.memory_space<vmem>>, vector<1x1xf32>
    tpu.vector_store %arg5[%c0_15, %c0_16], %36 {strides = array<i32>} : memref<1x1xf32, #tpu.memory_space<vmem>>, vector<1x1xf32>,
    return
  }
  func.func @transform_0(%arg0: i32) -> (i32, i32) {
    %c0_i32 = arith.constant 0 : i32
    %c0_i32_0 = arith.constant 0 : i32
    return %arg0, %c0_i32 : i32, i32
  }
  func.func @transform_1(%arg0: i32) -> (i32, i32) {
    %c0_i32 = arith.constant 0 : i32
    %c0_i32_0 = arith.constant 0 : i32
    return %arg0, %c0_i32 : i32, i32
  }
  func.func @transform_2(%arg0: i32) -> (i32, i32) {
    %c0_i32 = arith.constant 0 : i32
    %c0_i32_0 = arith.constant 0 : i32
    %c0_i32_1 = arith.constant 0 : i32
    return %c0_i32, %c0_i32_0 : i32, i32
  }
  func.func @transform_3(%arg0: i32) -> (i32, i32) {
    %c0_i32 = arith.constant 0 : i32
    %c0_i32_0 = arith.constant 0 : i32
    return %arg0, %c0_i32 : i32, i32
  }
  func.func @transform_4(%arg0: i32) -> (i32, i32) {
    %c0_i32 = arith.constant 0 : i32
    %c0_i32_0 = arith.constant 0 : i32
    return %arg0, %c0_i32 : i32, i32
  }
}

</mosaic_0001>

<llo_original>
// kernel: tpu_custom_call.1
$region0: #{tpu_custom_call.1}
  #allocation0 [shape = 'u32[]', space=smem, size = 0x4, offset = 0x4, fixed_abs, tag = 'smem constant byte address 0x4 - core index']
  #allocation1 [shape = 'u32[144,128]{1,0:T(1,128)}', space=vmem, size = 0x12000, scoped, tag = 'internal scratch']
  %s0 = inlined_call_operand.hbm [shape: s32[1,16], index: 0, kind: input, shape index: {}]
  %s1 = inlined_call_operand.vmem [shape: s32[1,16], index: 1, kind: input, shape index: {}]
  %s2 = inlined_call_operand.hbm [shape: f32[128,128], index: 2, kind: input, shape index: {}]
  %s3 = inlined_call_operand.hbm [shape: f32[16,128], index: 3, kind: output, shape index: {0}]
  %s4 = inlined_call_operand.hbm [shape: f32[1,1], index: 4, kind: output, shape index: {1}]
  %5 = xla_tuple %s3, %s4
  %s6 = sld [smem:[#allocation0]]
  $region38: #{tpu_custom_call.1} parent=0
    _
  %s8 = ssub.s32 1, %s6
  %s9 = scalar_select 0, %s8, %s6
  $region1: #{tpu_custom_call.1} parent=0
    #allocation2 [shape = 'u8[512]{0}', space=vmem, size = 0x400, scoped, tag = 'input window, operand 0, single buffered']
    #allocation3 [shape = 's32[1]{0}', space=sflag, size = 0x4, scoped, tag = 'scoped memory for tpu_custom_call.1']
    #allocation4 [shape = 's32[1]{0}', space=sflag, size = 0x4, scoped, tag = 'scoped memory for tpu_custom_call.1']
    #allocation5 [shape = 'u8[65536]{0}', space=vmem, size = 0x10000, scoped, tag = 'input window, operand 2, single buffered']
    #allocation6 [shape = 's32[1]{0}', space=sflag, size = 0x4, scoped, tag = 'scoped memory for tpu_custom_call.1']
    #allocation7 [shape = 'u8[8192]{0}', space=vmem, size = 0x2000, scoped, tag = 'output window, operand 0, single buffered']
    #allocation8 [shape = 'u8[512]{0}', space=vmem, size = 0x400, scoped, tag = 'output window, operand 1, single buffered']
    #allocation9 [shape = 's32[1]{0}', space=sflag, size = 0x4, scoped, tag = 'scoped memory for tpu_custom_call.1']
    %10 = vsyncpa [#allocation3], 0
    %11 = vsyncpa [#allocation6], 0
    %12 = vsyncpa [#allocation4], 0
    %13 = vsyncpa [#allocation9], 0
    // Predicated region
    $region2: #{tpu_custom_call.1} parent=1 // pred_check
      _
    $region3: #{tpu_custom_call.1} parent=1 // pred_check_branch
      %15 = sbr.rel (0) target = $region5
    $region4: #{tpu_custom_call.1} parent=1 // pred_region
      %s17 = ssub.s32 16, 16
      %18 = vsyncadd [#allocation3], %s17
      %s20 = sshll.u32 [#allocation2], 4
      %s21 = int_to_ptr.vmem [resolvable:$true] %s20
      %23 = dma.hbm_to_vmem [thread:$0]  %s0, 16, %s21, [#allocation3]
    $region5: #{tpu_custom_call.1} parent=1 // pred_fallthru
      _
    // Predicated region
    $region6: #{tpu_custom_call.1} parent=1 // pred_check
      _
    $region7: #{tpu_custom_call.1} parent=1 // pred_check_branch
      %25 = sbr.rel (0) target = $region9
    $region8: #{tpu_custom_call.1} parent=1 // pred_region
      _
    $region9: #{tpu_custom_call.1} parent=1 // pred_fallthru
      _
    // Predicated region
    $region10: #{tpu_custom_call.1} parent=1 // pred_check
      _
    $region11: #{tpu_custom_call.1} parent=1 // pred_check_branch
      %27 = sbr.rel (0) target = $region13
    $region12: #{tpu_custom_call.1} parent=1 // pred_region
      %s29 = ssub.s32 2048, 2048
      %30 = vsyncadd [#allocation6], %s29
      %s31 = sshll.u32 [#allocation5], 4
      %s32 = int_to_ptr.vmem [resolvable:$true] %s31
      %37 = dma.hbm_to_vmem [thread:$0]  %s2, 2048, %s32, [#allocation6], 128, 128, 8
    $region13: #{tpu_custom_call.1} parent=1 // pred_fallthru
      _
    // Predicated region
    $region14: #{tpu_custom_call.1} parent=1 // pred_check
      _
    $region15: #{tpu_custom_call.1} parent=1 // pred_check_branch
      %39 = sbr.rel (0) target = $region17
    $region16: #{tpu_custom_call.1} parent=1 // pred_region
      %40 = dma.done [#allocation3], 16
    $region17: #{tpu_custom_call.1} parent=1 // pred_fallthru
      _
    // Predicated region
    $region18: #{tpu_custom_call.1} parent=1 // pred_check
      _
    $region19: #{tpu_custom_call.1} parent=1 // pred_check_branch
      %42 = sbr.rel (0) target = $region21
    $region20: #{tpu_custom_call.1} parent=1 // pred_region
      %43 = dma.done [#allocation6], 2048
    $region21: #{tpu_custom_call.1} parent=1 // pred_fallthru
      _
    %v44 = vld [vmem:[#allocation2] sm:$0x1]
    %v45 = vld [vmem:[%s1] sm:$0x1]
    %v46 = vlaneseq
    %v47 = vshrl.u32 %v46, 7
    %v48 = vadd.s32 %v47, 8
    %v49 = vadd.s32 %v47, 16
    %v50 = vadd.s32 %v47, 24
    %v51 = vadd.s32 %v47, 32
    %v52 = vadd.s32 %v47, 40
    %v53 = vadd.s32 %v47, 48
    %v54 = vadd.s32 %v47, 56
    %v55 = vadd.s32 %v47, 64
    %v56 = vadd.s32 %v47, 72
    %v57 = vadd.s32 %v47, 80
    %v58 = vadd.s32 %v47, 88
    %v59 = vadd.s32 %v47, 96
    %v60 = vadd.s32 %v47, 104
    %v61 = vadd.s32 %v47, 112
    %v62 = vadd.s32 %v47, 120
    %v63 = vlaneseq
    %v64 = vshrl.u32 %v63, 7
    %v65 = vsub.s32 0, %v64
    %v66 = vrot.slane %v44, %v65
    %vm67 = vcmp.eq.s32.totalorder %v47, %v66
    %vm68 = vcmp.eq.s32.totalorder %v48, %v66
    %vm69 = vcmp.eq.s32.totalorder %v49, %v66
    %vm70 = vcmp.eq.s32.totalorder %v50, %v66
    %vm71 = vcmp.eq.s32.totalorder %v51, %v66
    %vm72 = vcmp.eq.s32.totalorder %v52, %v66
    %vm73 = vcmp.eq.s32.totalorder %v53, %v66
    %vm74 = vcmp.eq.s32.totalorder %v54, %v66
    %vm75 = vcmp.eq.s32.totalorder %v55, %v66
    %vm76 = vcmp.eq.s32.totalorder %v56, %v66
    %vm77 = vcmp.eq.s32.totalorder %v57, %v66
    %vm78 = vcmp.eq.s32.totalorder %v58, %v66
    %vm79 = vcmp.eq.s32.totalorder %v59, %v66
    %vm80 = vcmp.eq.s32.totalorder %v60, %v66
    %vm81 = vcmp.eq.s32.totalorder %v61, %v66
    %vm82 = vcmp.eq.s32.totalorder %v62, %v66
    %v83 = vsel %vm67, 1, 0
    %v84 = vsel %vm68, 1, 0
    %v85 = vsel %vm69, 1, 0
    %v86 = vsel %vm70, 1, 0
    %v87 = vsel %vm71, 1, 0
    %v88 = vsel %vm72, 1, 0
    %v89 = vsel %vm73, 1, 0
    %v90 = vsel %vm74, 1, 0
    %v91 = vsel %vm75, 1, 0
    %v92 = vsel %vm76, 1, 0
    %v93 = vsel %vm77, 1, 0
    %v94 = vsel %vm78, 1, 0
    %v95 = vsel %vm79, 1, 0
    %v96 = vsel %vm80, 1, 0
    %v97 = vsel %vm81, 1, 0
    %v98 = vsel %vm82, 1, 0
    %v99 = vcvt.s32.f32 %v83
    %v100 = vcvt.s32.f32 %v84
    %v101 = vcvt.s32.f32 %v85
    %v102 = vcvt.s32.f32 %v86
    %v103 = vcvt.s32.f32 %v87
    %v104 = vcvt.s32.f32 %v88
    %v105 = vcvt.s32.f32 %v89
    %v106 = vcvt.s32.f32 %v90
    %v107 = vcvt.s32.f32 %v91
    %v108 = vcvt.s32.f32 %v92
    %v109 = vcvt.s32.f32 %v93
    %v110 = vcvt.s32.f32 %v94
    %v111 = vcvt.s32.f32 %v95
    %v112 = vcvt.s32.f32 %v96
    %v113 = vcvt.s32.f32 %v97
    %v114 = vcvt.s32.f32 %v98
    %v115 = vld [vmem:[#allocation5] sm:$0xff]
    %v116 = vld [vmem:[#allocation5 + $0x8] sm:$0xff]
    %v117 = vld [vmem:[#allocation5 + $0x10] sm:$0xff]
    %v118 = vld [vmem:[#allocation5 + $0x18] sm:$0xff]
    %v119 = vld [vmem:[#allocation5 + $0x20] sm:$0xff]
    %v120 = vld [vmem:[#allocation5 + $0x28] sm:$0xff]
    %v121 = vld [vmem:[#allocation5 + $0x30] sm:$0xff]
    %v122 = vld [vmem:[#allocation5 + $0x38] sm:$0xff]
    %v123 = vld [vmem:[#allocation5 + $0x40] sm:$0xff]
    %v124 = vld [vmem:[#allocation5 + $0x48] sm:$0xff]
    %v125 = vld [vmem:[#allocation5 + $0x50] sm:$0xff]
    %v126 = vld [vmem:[#allocation5 + $0x58] sm:$0xff]
    %v127 = vld [vmem:[#allocation5 + $0x60] sm:$0xff]
    %v128 = vld [vmem:[#allocation5 + $0x68] sm:$0xff]
    %v129 = vld [vmem:[#allocation5 + $0x70] sm:$0xff]
    %v130 = vld [vmem:[#allocation5 + $0x78] sm:$0xff]
    %131 = vxpose.xlu0.b32.start [1/16] %v99, 128
    %132 = vxpose.xlu0.b32.cont [2/16] %v100, 128
    %133 = vxpose.xlu0.b32.cont [3/16] %v101, 128
    %134 = vxpose.xlu0.b32.cont [4/16] %v102, 128
    %135 = vxpose.xlu0.b32.cont [5/16] %v103, 128
    %136 = vxpose.xlu0.b32.cont [6/16] %v104, 128
    %137 = vxpose.xlu0.b32.cont [7/16] %v105, 128
    %138 = vxpose.xlu0.b32.cont [8/16] %v106, 128
    %139 = vxpose.xlu0.b32.cont [9/16] %v107, 128
    %140 = vxpose.xlu0.b32.cont [10/16] %v108, 128
    %141 = vxpose.xlu0.b32.cont [11/16] %v109, 128
    %142 = vxpose.xlu0.b32.cont [12/16] %v110, 128
    %143 = vxpose.xlu0.b32.cont [13/16] %v111, 128
    %144 = vxpose.xlu0.b32.cont [14/16] %v112, 128
    %145 = vxpose.xlu0.b32.cont [15/16] %v113, 128
    %146 = vxpose.xlu0.b32.end [16/16] %v114, 128
    %v147 = vpop.trf.xlu0
    %v148 = vpop.trf.xlu0
    %v149 = vpop.trf.xlu0
    %v150 = vpop.trf.xlu0
    %v151 = vpop.trf.xlu0
    %v152 = vpop.trf.xlu0
    %v153 = vpop.trf.xlu0
    %v154 = vpop.trf.xlu0
    %v155 = vpop.trf.xlu0
    %v156 = vpop.trf.xlu0
    %v157 = vpop.trf.xlu0
    %v158 = vpop.trf.xlu0
    %v159 = vpop.trf.xlu0
    %v160 = vpop.trf.xlu0
    %v161 = vpop.trf.xlu0
    %v162 = vpop.trf.xlu0
    %163 = vmatprep.subr.mxu0 0.0
    %164 = vmatpush1.msra.mxu0 %v115
    %165 = vmatprep.subr.mxu0 0.0
    %166 = vmatpush1.msra.mxu0 %v116
    %167 = vmatprep.subr.mxu0 0.0
    %168 = vmatpush1.msra.mxu0 %v117
    %169 = vmatprep.subr.mxu0 0.0
    %170 = vmatpush1.msra.mxu0 %v118
    %171 = vmatprep.subr.mxu0 0.0
    %172 = vmatpush1.msra.mxu0 %v119
    %173 = vmatprep.subr.mxu0 0.0
    %174 = vmatpush1.msra.mxu0 %v120
    %175 = vmatprep.subr.mxu0 0.0
    %176 = vmatpush1.msra.mxu0 %v121
    %177 = vmatprep.subr.mxu0 0.0
    %178 = vmatpush1.msra.mxu0 %v122
    %179 = vmatprep.subr.mxu0 0.0
    %180 = vmatpush1.msra.mxu0 %v123
    %181 = vmatprep.subr.mxu0 0.0
    %182 = vmatpush1.msra.mxu0 %v124
    %183 = vmatprep.subr.mxu0 0.0
    %184 = vmatpush1.msra.mxu0 %v125
    %185 = vmatprep.subr.mxu0 0.0
    %186 = vmatpush1.msra.mxu0 %v126
    %187 = vmatprep.subr.mxu0 0.0
    %188 = vmatpush1.msra.mxu0 %v127
    %189 = vmatprep.subr.mxu0 0.0
    %190 = vmatpush1.msra.mxu0 %v128
    %191 = vmatprep.subr.mxu0 0.0
    %192 = vmatpush1.msra.mxu0 %v129
    %193 = vmatprep.subr.mxu0 0.0
    %194 = vmatpush1.msra.mxu0 %v130
    %195 = vmatprep.subr.mxu0 0.0
    %196 = vmatpush1.msra.mxu0 0.0
    %197 = vmatprep.subr.mxu0 0.0
    %198 = vmatpush1.msra.mxu0 0.0
    %199 = vmatprep.subr.mxu0 0.0
    %200 = vmatpush1.msra.mxu0 0.0
    %201 = vmatprep.subr.mxu0 0.0
    %202 = vmatpush1.msra.mxu0 0.0
    %203 = vmatprep.subr.mxu0 0.0
    %204 = vmatpush1.msra.mxu0 0.0
    %205 = vmatprep.subr.mxu0 0.0
    %206 = vmatpush1.msra.mxu0 0.0
    %207 = vmatprep.subr.mxu0 0.0
    %208 = vmatpush1.msra.mxu0 0.0
    %209 = vmatprep.subr.mxu0 0.0
    %210 = vmatpush1.msra.mxu0 0.0
    %211 = vmatprep.subr.mxu0 0.0
    %212 = vmatpush1.msra.mxu0 0.0
    %213 = vmatprep.subr.mxu0 0.0
    %214 = vmatpush1.msra.mxu0 0.0
    %215 = vmatprep.subr.mxu0 0.0
    %216 = vmatpush1.msra.mxu0 0.0
    %217 = vmatprep.subr.mxu0 0.0
    %218 = vmatpush1.msra.mxu0 0.0
    %219 = vmatprep.subr.mxu0 0.0
    %220 = vmatpush1.msra.mxu0 0.0
    %221 = vmatprep.subr.mxu0 0.0
    %222 = vmatpush1.msra.mxu0 0.0
    %223 = vmatprep.subr.mxu0 0.0
    %224 = vmatpush1.msra.mxu0 0.0
    %225 = vmatprep.subr.mxu0 0.0
    %226 = vmatpush1.msra.mxu0 0.0
    %227 = vmatprep.mubr.f32.mxu0 0.0
    %228 = vmatmul.mubr.f32.gmra.mrb[0].mxu0 %v147
    %v229 = vpop.f32.mrb[0].mxu0
    %v230 = vadd.f32 0.0, %v229
    %v231 = vpop.f32.mrb[0].mxu0
    %232 = vmatprep.mubr.f32.mxu0 0.0
    %233 = vmatmul.mubr.f32.gmra.mrb[0].mxu0 %v148
    %v234 = vpop.f32.mrb[0].mxu0
    %v235 = vadd.f32 0.0, %v234
    %v236 = vpop.f32.mrb[0].mxu0
    %237 = vdwg.mxu0
    %238 = vst [vmem:[#allocation7] sm:$0xff] %v230
    %239 = vst [vmem:[#allocation7 + $0x8] sm:$0xff] %v235
    %240 = vxpose.xlu0.b32.start [1/16] %v115, 128
    %241 = vxpose.xlu0.b32.cont [2/16] %v116, 128
    %242 = vxpose.xlu0.b32.cont [3/16] %v117, 128
    %243 = vxpose.xlu0.b32.cont [4/16] %v118, 128
    %244 = vxpose.xlu0.b32.cont [5/16] %v119, 128
    %245 = vxpose.xlu0.b32.cont [6/16] %v120, 128
    %246 = vxpose.xlu0.b32.cont [7/16] %v121, 128
    %247 = vxpose.xlu0.b32.cont [8/16] %v122, 128
    %248 = vxpose.xlu0.b32.cont [9/16] %v123, 128
    %249 = vxpose.xlu0.b32.cont [10/16] %v124, 128
    %250 = vxpose.xlu0.b32.cont [11/16] %v125, 128
    %251 = vxpose.xlu0.b32.cont [12/16] %v126, 128
    %252 = vxpose.xlu0.b32.cont [13/16] %v127, 128
    %253 = vxpose.xlu0.b32.cont [14/16] %v128, 128
    %254 = vxpose.xlu0.b32.cont [15/16] %v129, 128
    %255 = vxpose.xlu0.b32.end [16/16] %v130, 128
    %v256 = vpop.trf.xlu0
    %v257 = vpop.trf.xlu0
    %v258 = vpop.trf.xlu0
    %v259 = vpop.trf.xlu0
    %v260 = vpop.trf.xlu0
    %v261 = vpop.trf.xlu0
    %v262 = vpop.trf.xlu0
    %v263 = vpop.trf.xlu0
    %v264 = vpop.trf.xlu0
    %v265 = vpop.trf.xlu0
    %v266 = vpop.trf.xlu0
    %v267 = vpop.trf.xlu0
    %v268 = vpop.trf.xlu0
    %v269 = vpop.trf.xlu0
    %v270 = vpop.trf.xlu0
    %v271 = vpop.trf.xlu0
    %272 = vmatprep.subr.mxu0 0.0
    %273 = vmatpush1.msra.mxu0 %v99
    %274 = vmatprep.subr.mxu0 0.0
    %275 = vmatpush1.msra.mxu0 %v100
    %276 = vmatprep.subr.mxu0 0.0
    %277 = vmatpush1.msra.mxu0 %v101
    %278 = vmatprep.subr.mxu0 0.0
    %279 = vmatpush1.msra.mxu0 %v102
    %280 = vmatprep.subr.mxu0 0.0
    %281 = vmatpush1.msra.mxu0 %v103
    %282 = vmatprep.subr.mxu0 0.0
    %283 = vmatpush1.msra.mxu0 %v104
    %284 = vmatprep.subr.mxu0 0.0
    %285 = vmatpush1.msra.mxu0 %v105
    %286 = vmatprep.subr.mxu0 0.0
    %287 = vmatpush1.msra.mxu0 %v106
    %288 = vmatprep.subr.mxu0 0.0
    %289 = vmatpush1.msra.mxu0 %v107
    %290 = vmatprep.subr.mxu0 0.0
    %291 = vmatpush1.msra.mxu0 %v108
    %292 = vmatprep.subr.mxu0 0.0
    %293 = vmatpush1.msra.mxu0 %v109
    %294 = vmatprep.subr.mxu0 0.0
    %295 = vmatpush1.msra.mxu0 %v110
    %296 = vmatprep.subr.mxu0 0.0
    %297 = vmatpush1.msra.mxu0 %v111
    %298 = vmatprep.subr.mxu0 0.0
    %299 = vmatpush1.msra.mxu0 %v112
    %300 = vmatprep.subr.mxu0 0.0
    %301 = vmatpush1.msra.mxu0 %v113
    %302 = vmatprep.subr.mxu0 0.0
    %303 = vmatpush1.msra.mxu0 %v114
    %304 = vmatprep.subr.mxu0 0.0
    %305 = vmatpush1.msra.mxu0 0.0
    %306 = vmatprep.subr.mxu0 0.0
    %307 = vmatpush1.msra.mxu0 0.0
    %308 = vmatprep.subr.mxu0 0.0
    %309 = vmatpush1.msra.mxu0 0.0
    %310 = vmatprep.subr.mxu0 0.0
    %311 = vmatpush1.msra.mxu0 0.0
    %312 = vmatprep.subr.mxu0 0.0
    %313 = vmatpush1.msra.mxu0 0.0
    %314 = vmatprep.subr.mxu0 0.0
    %315 = vmatpush1.msra.mxu0 0.0
    %316 = vmatprep.subr.mxu0 0.0
    %317 = vmatpush1.msra.mxu0 0.0
    %318 = vmatprep.subr.mxu0 0.0
    %319 = vmatpush1.msra.mxu0 0.0
    %320 = vmatprep.subr.mxu0 0.0
    %321 = vmatpush1.msra.mxu0 0.0
    %322 = vmatprep.subr.mxu0 0.0
    %323 = vmatpush1.msra.mxu0 0.0
    %324 = vmatprep.subr.mxu0 0.0
    %325 = vmatpush1.msra.mxu0 0.0
    %326 = vmatprep.subr.mxu0 0.0
    %327 = vmatpush1.msra.mxu0 0.0
    %328 = vmatprep.subr.mxu0 0.0
    %329 = vmatpush1.msra.mxu0 0.0
    %330 = vmatprep.subr.mxu0 0.0
    %331 = vmatpush1.msra.mxu0 0.0
    %332 = vmatprep.subr.mxu0 0.0
    %333 = vmatpush1.msra.mxu0 0.0
    %334 = vmatprep.subr.mxu0 0.0
    %335 = vmatpush1.msra.mxu0 0.0
    %336 = vmatprep.mubr.f32.mxu0 0.0
    %337 = vmatmul.mubr.f32.gmra.mrb[0].mxu0 %v256
    %v338 = vpop.f32.mrb[0].mxu0
    %v339 = vadd.f32 0.0, %v338
    %v340 = vpop.f32.mrb[0].mxu0
    %341 = vmatprep.mubr.f32.mxu0 0.0
    %342 = vmatmul.mubr.f32.gmra.mrb[0].mxu0 %v257
    %v343 = vpop.f32.mrb[0].mxu0
    %v344 = vadd.f32 0.0, %v343
    %v345 = vpop.f32.mrb[0].mxu0
    %346 = vmatprep.mubr.f32.mxu0 0.0
    %347 = vmatmul.mubr.f32.gmra.mrb[0].mxu0 %v258
    %v348 = vpop.f32.mrb[0].mxu0
    %v349 = vadd.f32 0.0, %v348
    %v350 = vpop.f32.mrb[0].mxu0
    %351 = vmatprep.mubr.f32.mxu0 0.0
    %352 = vmatmul.mubr.f32.gmra.mrb[0].mxu0 %v259
    %v353 = vpop.f32.mrb[0].mxu0
    %v354 = vadd.f32 0.0, %v353
    %v355 = vpop.f32.mrb[0].mxu0
    %356 = vmatprep.mubr.f32.mxu0 0.0
    %357 = vmatmul.mubr.f32.gmra.mrb[0].mxu0 %v260
    %v358 = vpop.f32.mrb[0].mxu0
    %v359 = vadd.f32 0.0, %v358
    %v360 = vpop.f32.mrb[0].mxu0
    %361 = vmatprep.mubr.f32.mxu0 0.0
    %362 = vmatmul.mubr.f32.gmra.mrb[0].mxu0 %v261
    %v363 = vpop.f32.mrb[0].mxu0
    %v364 = vadd.f32 0.0, %v363
    %v365 = vpop.f32.mrb[0].mxu0
    %366 = vmatprep.mubr.f32.mxu0 0.0
    %367 = vmatmul.mubr.f32.gmra.mrb[0].mxu0 %v262
    %v368 = vpop.f32.mrb[0].mxu0
    %v369 = vadd.f32 0.0, %v368
    %v370 = vpop.f32.mrb[0].mxu0
    %371 = vmatprep.mubr.f32.mxu0 0.0
    %372 = vmatmul.mubr.f32.gmra.mrb[0].mxu0 %v263
    %v373 = vpop.f32.mrb[0].mxu0
    %v374 = vadd.f32 0.0, %v373
    %v375 = vpop.f32.mrb[0].mxu0
    %376 = vmatprep.mubr.f32.mxu0 0.0
    %377 = vmatmul.mubr.f32.gmra.mrb[0].mxu0 %v264
    %v378 = vpop.f32.mrb[0].mxu0
    %v379 = vadd.f32 0.0, %v378
    %v380 = vpop.f32.mrb[0].mxu0
    %381 = vmatprep.mubr.f32.mxu0 0.0
    %382 = vmatmul.mubr.f32.gmra.mrb[0].mxu0 %v265
    %v383 = vpop.f32.mrb[0].mxu0
    %v384 = vadd.f32 0.0, %v383
    %v385 = vpop.f32.mrb[0].mxu0
    %386 = vmatprep.mubr.f32.mxu0 0.0
    %387 = vmatmul.mubr.f32.gmra.mrb[0].mxu0 %v266
    %v388 = vpop.f32.mrb[0].mxu0
    %v389 = vadd.f32 0.0, %v388
    %v390 = vpop.f32.mrb[0].mxu0
    %391 = vmatprep.mubr.f32.mxu0 0.0
    %392 = vmatmul.mubr.f32.gmra.mrb[0].mxu0 %v267
    %v393 = vpop.f32.mrb[0].mxu0
    %v394 = vadd.f32 0.0, %v393
    %v395 = vpop.f32.mrb[0].mxu0
    %396 = vmatprep.mubr.f32.mxu0 0.0
    %397 = vmatmul.mubr.f32.gmra.mrb[0].mxu0 %v268
    %v398 = vpop.f32.mrb[0].mxu0
    %v399 = vadd.f32 0.0, %v398
    %v400 = vpop.f32.mrb[0].mxu0
    %401 = vmatprep.mubr.f32.mxu0 0.0
    %402 = vmatmul.mubr.f32.gmra.mrb[0].mxu0 %v269
    %v403 = vpop.f32.mrb[0].mxu0
    %v404 = vadd.f32 0.0, %v403
    %v405 = vpop.f32.mrb[0].mxu0
    %406 = vmatprep.mubr.f32.mxu0 0.0
    %407 = vmatmul.mubr.f32.gmra.mrb[0].mxu0 %v270
    %v408 = vpop.f32.mrb[0].mxu0
    %v409 = vadd.f32 0.0, %v408
    %v410 = vpop.f32.mrb[0].mxu0
    %411 = vmatprep.mubr.f32.mxu0 0.0
    %412 = vmatmul.mubr.f32.gmra.mrb[0].mxu0 %v271
    %v413 = vpop.f32.mrb[0].mxu0
    %v414 = vadd.f32 0.0, %v413
    %v415 = vpop.f32.mrb[0].mxu0
    %416 = vdwg.mxu0
    %vm417 = vcmask 130048
    %v418 = vsel %vm417, %v339, -inf
    %v419 = vsel %vm417, %v344, -inf
    %v420 = vsel %vm417, %v349, -inf
    %v421 = vsel %vm417, %v354, -inf
    %v422 = vsel %vm417, %v359, -inf
    %v423 = vmax.f32 %v418, %v422
    %v424 = vsel %vm417, %v364, -inf
    %v425 = vmax.f32 %v419, %v424
    %v426 = vsel %vm417, %v369, -inf
    %v427 = vmax.f32 %v420, %v426
    %v428 = vsel %vm417, %v374, -inf
    %v429 = vmax.f32 %v421, %v428
    %v430 = vsel %vm417, %v379, -inf
    %v431 = vmax.f32 %v423, %v430
    %v432 = vsel %vm417, %v384, -inf
    %v433 = vmax.f32 %v425, %v432
    %v434 = vsel %vm417, %v389, -inf
    %v435 = vmax.f32 %v427, %v434
    %v436 = vsel %vm417, %v394, -inf
    %v437 = vmax.f32 %v429, %v436
    %v438 = vsel %vm417, %v399, -inf
    %v439 = vmax.f32 %v431, %v438
    %v440 = vsel %vm417, %v404, -inf
    %v441 = vmax.f32 %v433, %v440
    %v442 = vsel %vm417, %v409, -inf
    %v443 = vmax.f32 %v435, %v442
    %v444 = vsel %vm417, %v414, -inf
    %v445 = vmax.f32 %v437, %v444
    %v446 = vmax.f32 %v439, %v441
    %v447 = vmax.f32 %v443, %v445
    %v448 = vmax.f32 %v446, %v447
    %v449 = vrot.slane %v448, 4
    %v450 = vmax.f32 %v448, %v449
    %v451 = vrot.slane %v450, 2
    %v452 = vmax.f32 %v450, %v451
    %v453 = vrot.slane %v452, 1
    %v454 = vmax.f32 %v452, %v453
    %v455 = vsub.f32 %v339, %v454
    %v456 = vsub.f32 %v344, %v454
    %v457 = vsub.f32 %v349, %v454
    %v458 = vsub.f32 %v354, %v454
    %v459 = vsub.f32 %v359, %v454
    %v460 = vsub.f32 %v364, %v454
    %v461 = vsub.f32 %v369, %v454
    %v462 = vsub.f32 %v374, %v454
    %v463 = vsub.f32 %v379, %v454
    %v464 = vsub.f32 %v384, %v454
    %v465 = vsub.f32 %v389, %v454
    %v466 = vsub.f32 %v394, %v454
    %v467 = vsub.f32 %v399, %v454
    %v468 = vsub.f32 %v404, %v454
    %v469 = vsub.f32 %v409, %v454
    %v470 = vsub.f32 %v414, %v454
    %v471 = vmul.f32 %v455, 1.442695
    %v472 = vpow.pop %v471
    %v473 = vmul.f32 %v456, 1.442695
    %v474 = vpow.pop %v473
    %v475 = vmul.f32 %v457, 1.442695
    %v476 = vpow.pop %v475
    %v477 = vmul.f32 %v458, 1.442695
    %v478 = vpow.pop %v477
    %v479 = vmul.f32 %v459, 1.442695
    %v480 = vpow.pop %v479
    %v481 = vmul.f32 %v460, 1.442695
    %v482 = vpow.pop %v481
    %v483 = vmul.f32 %v461, 1.442695
    %v484 = vpow.pop %v483
    %v485 = vmul.f32 %v462, 1.442695
    %v486 = vpow.pop %v485
    %v487 = vmul.f32 %v463, 1.442695
    %v488 = vpow.pop %v487
    %v489 = vmul.f32 %v464, 1.442695
    %v490 = vpow.pop %v489
    %v491 = vmul.f32 %v465, 1.442695
    %v492 = vpow.pop %v491
    %v493 = vmul.f32 %v466, 1.442695
    %v494 = vpow.pop %v493
    %v495 = vmul.f32 %v467, 1.442695
    %v496 = vpow.pop %v495
    %v497 = vmul.f32 %v468, 1.442695
    %v498 = vpow.pop %v497
    %v499 = vmul.f32 %v469, 1.442695
    %v500 = vpow.pop %v499
    %v501 = vmul.f32 %v470, 1.442695
    %v502 = vpow.pop %v501
    %v503 = vsel %vm417, %v472, 0.0
    %v504 = vsel %vm417, %v474, 0.0
    %v505 = vadd.f32 %v503, %v504
    %v506 = vsel %vm417, %v476, 0.0
    %v507 = vadd.f32 %v505, %v506
    %v508 = vsel %vm417, %v478, 0.0
    %v509 = vadd.f32 %v507, %v508
    %v510 = vsel %vm417, %v480, 0.0
    %v511 = vadd.f32 %v509, %v510
    %v512 = vsel %vm417, %v482, 0.0
    %v513 = vadd.f32 %v511, %v512
    %v514 = vsel %vm417, %v484, 0.0
    %v515 = vadd.f32 %v513, %v514
    %v516 = vsel %vm417, %v486, 0.0
    %v517 = vadd.f32 %v515, %v516
    %v518 = vsel %vm417, %v488, 0.0
    %v519 = vadd.f32 %v517, %v518
    %v520 = vsel %vm417, %v490, 0.0
    %v521 = vadd.f32 %v519, %v520
    %v522 = vsel %vm417, %v492, 0.0
    %v523 = vadd.f32 %v521, %v522
    %v524 = vsel %vm417, %v494, 0.0
    %v525 = vadd.f32 %v523, %v524
    %v526 = vsel %vm417, %v496, 0.0
    %v527 = vadd.f32 %v525, %v526
    %v528 = vsel %vm417, %v498, 0.0
    %v529 = vadd.f32 %v527, %v528
    %v530 = vsel %vm417, %v500, 0.0
    %v531 = vadd.f32 %v529, %v530
    %v532 = vsel %vm417, %v502, 0.0
    %v533 = vadd.f32 %v531, %v532
    %v534 = vrot.slane %v533, 4
    %v535 = vadd.f32 %v533, %v534
    %v536 = vrot.slane %v535, 2
    %v537 = vadd.f32 %v535, %v536
    %v538 = vrot.slane %v537, 1
    %v539 = vadd.f32 %v537, %v538
    %v540 = vlog2.pop %v539
    %v541 = vmul.f32 %v540, 0.6931472
    %v542 = vadd.f32 %v454, %v541
    %v543 = vlaneseq
    %v544 = vshrl.u32 %v543, 7
    %v545 = vsub.s32 0, %v544
    %v546 = vrot.slane %v45, %v545
    %vm547 = vcmp.eq.s32.totalorder %v47, %v546
    %vm548 = vcmp.eq.s32.totalorder %v48, %v546
    %vm549 = vcmp.eq.s32.totalorder %v49, %v546
    %vm550 = vcmp.eq.s32.totalorder %v50, %v546
    %vm551 = vcmp.eq.s32.totalorder %v51, %v546
    %vm552 = vcmp.eq.s32.totalorder %v52, %v546
    %vm553 = vcmp.eq.s32.totalorder %v53, %v546
    %vm554 = vcmp.eq.s32.totalorder %v54, %v546
    %vm555 = vcmp.eq.s32.totalorder %v55, %v546
    %vm556 = vcmp.eq.s32.totalorder %v56, %v546
    %vm557 = vcmp.eq.s32.totalorder %v57, %v546
    %vm558 = vcmp.eq.s32.totalorder %v58, %v546
    %vm559 = vcmp.eq.s32.totalorder %v59, %v546
    %vm560 = vcmp.eq.s32.totalorder %v60, %v546
    %vm561 = vcmp.eq.s32.totalorder %v61, %v546
    %vm562 = vcmp.eq.s32.totalorder %v62, %v546
    %v563 = vsel %vm547, %v339, 0.0
    %v564 = vsel %vm548, %v344, 0.0
    %v565 = vsel %vm549, %v349, 0.0
    %v566 = vsel %vm550, %v354, 0.0
    %v567 = vsel %vm551, %v359, 0.0
    %v568 = vsel %vm552, %v364, 0.0
    %v569 = vsel %vm553, %v369, 0.0
    %v570 = vsel %vm554, %v374, 0.0
    %v571 = vsel %vm555, %v379, 0.0
    %v572 = vsel %vm556, %v384, 0.0
    %v573 = vsel %vm557, %v389, 0.0
    %v574 = vsel %vm558, %v394, 0.0
    %v575 = vsel %vm559, %v399, 0.0
    %v576 = vsel %vm560, %v404, 0.0
    %v577 = vsel %vm561, %v409, 0.0
    %v578 = vsel %vm562, %v414, 0.0
    %v579 = vsel %vm417, %v563, 0.0
    %v580 = vsel %vm417, %v564, 0.0
    %v581 = vadd.f32 %v579, %v580
    %v582 = vsel %vm417, %v565, 0.0
    %v583 = vadd.f32 %v581, %v582
    %v584 = vsel %vm417, %v566, 0.0
    %v585 = vadd.f32 %v583, %v584
    %v586 = vsel %vm417, %v567, 0.0
    %v587 = vadd.f32 %v585, %v586
    %v588 = vsel %vm417, %v568, 0.0
    %v589 = vadd.f32 %v587, %v588
    %v590 = vsel %vm417, %v569, 0.0
    %v591 = vadd.f32 %v589, %v590
    %v592 = vsel %vm417, %v570, 0.0
    %v593 = vadd.f32 %v591, %v592
    %v594 = vsel %vm417, %v571, 0.0
    %v595 = vadd.f32 %v593, %v594
    %v596 = vsel %vm417, %v572, 0.0
    %v597 = vadd.f32 %v595, %v596
    %v598 = vsel %vm417, %v573, 0.0
    %v599 = vadd.f32 %v597, %v598
    %v600 = vsel %vm417, %v574, 0.0
    %v601 = vadd.f32 %v599, %v600
    %v602 = vsel %vm417, %v575, 0.0
    %v603 = vadd.f32 %v601, %v602
    %v604 = vsel %vm417, %v576, 0.0
    %v605 = vadd.f32 %v603, %v604
    %v606 = vsel %vm417, %v577, 0.0
    %v607 = vadd.f32 %v605, %v606
    %v608 = vsel %vm417, %v578, 0.0
    %v609 = vadd.f32 %v607, %v608
    %v610 = vrot.slane %v609, 4
    %v611 = vadd.f32 %v609, %v610
    %v612 = vrot.slane %v611, 2
    %v613 = vadd.f32 %v611, %v612
    %v614 = vrot.slane %v613, 1
    %v615 = vadd.f32 %v613, %v614
    %v616 = vsub.f32 %v542, %v615
    %s617 = smul.u32 0, 16
    %v618 = vlaneseq
    %v619 = vand.u32 %v618, 127
    %v620 = vstv %s617
    %v621 = vadd.s32 %v620, %v619
    %vm622 = vcmp.lt.s32.totalorder %v621, 16
    %v623 = vsel %vm622, %v616, 0.0
    %v624 = vsel %vm417, %v623, 0.0
    %625 = vadd.xlane.f32.xlu0 %v624
    %v626 = vpop.xlane.xlu0 %625
    %vm627 = vcmask 0
    %628 = vst.msk [vmem:[#allocation8] sm:$0x1] %vm627, %v626
    // Predicated region
    $region22: #{tpu_custom_call.1} parent=1 // pred_check
      _
    $region23: #{tpu_custom_call.1} parent=1 // pred_check_branch
      %630 = sbr.rel (0) target = $region25
    $region24: #{tpu_custom_call.1} parent=1 // pred_region
      %s632 = ssub.s32 256, 256
      %633 = vsyncadd [#allocation4], %s632
      %s634 = sshll.u32 [#allocation7], 4
      %s635 = int_to_ptr.vmem [resolvable:$true] %s634
      %640 = dma.vmem_to_hbm [thread:$0]  %s635, 256, %s3, [#allocation4], 128, 128, 8
    $region25: #{tpu_custom_call.1} parent=1 // pred_fallthru
      _
    // Predicated region
    $region26: #{tpu_custom_call.1} parent=1 // pred_check
      _
    $region27: #{tpu_custom_call.1} parent=1 // pred_check_branch
      %642 = sbr.rel (0) target = $region29
    $region28: #{tpu_custom_call.1} parent=1 // pred_region
      %s644 = ssub.s32 16, 16
      %645 = vsyncadd [#allocation9], %s644
      %s647 = sshll.u32 [#allocation8], 4
      %s648 = int_to_ptr.vmem [resolvable:$true] %s647
      %650 = dma.vmem_to_hbm [thread:$0]  %s648, 16, %s4, [#allocation9]
    $region29: #{tpu_custom_call.1} parent=1 // pred_fallthru
      _
    // Predicated region
    $region30: #{tpu_custom_call.1} parent=1 // pred_check
      _
    $region31: #{tpu_custom_call.1} parent=1 // pred_check_branch
      %652 = sbr.rel (0) target = $region33
    $region32: #{tpu_custom_call.1} parent=1 // pred_region
      %653 = dma.done [#allocation4], 256
    $region33: #{tpu_custom_call.1} parent=1 // pred_fallthru
      _
    // Predicated region
    $region34: #{tpu_custom_call.1} parent=1 // pred_check
      _
    $region35: #{tpu_custom_call.1} parent=1 // pred_check_branch
      %655 = sbr.rel (0) target = $region37
    $region36: #{tpu_custom_call.1} parent=1 // pred_region
      %656 = dma.done [#allocation9], 16
    $region37: #{tpu_custom_call.1} parent=1 // pred_fallthru
      _
    %657 = vsyncpa [#allocation3], 1
    %658 = vsyncpa [#allocation6], 1
    %659 = vsyncpa [#allocation4], 1
    %660 = vsyncpa [#allocation9], 1

</llo_original>
